<compile_context>
chip_gen: v5e
topology: v5e:2x2
jax: 0.10.0
libtpu: 0.0.40
codegen_flags: <defaults>
</compile_context>

<pallas_src>
import functools

import jax
import jax.numpy as jnp
import numpy as np
from jax import lax
from jax.experimental import pallas as pl
from jax.experimental.pallas import tpu as pltpu


def _linear_attention_kernel(*refs, heads, dim_head, block_b, eps,
                             mm_dtype, attn_dtype, approx_recip,
                             fuse_attention):
    if fuse_attention:
        (x_ref, wqkv_ref, wout_ref, bout_ref, gamma_ref, beta_ref,
         samp_ref, mask_ref, o_ref) = refs
    else:
        (x_ref, wqkv_ref, wout_ref, bout_ref, gamma_ref, beta_ref,
         samp_ref, o_ref) = refs
        mask_ref = None

    hidden = heads * dim_head
    bh = block_b * hidden            # stacked q/k/v rows (sample-major)
    g = block_b * heads              # (sample, head) groups
    bc = x_ref.shape[0]              # block_b * C
    c = bc // block_b
    n = x_ref.shape[1]
    scale = dim_head ** (-0.5)
    inv_count = 1.0 / (c * n)

    x = x_ref[...]                                                    # (bb*C, N)

    # ---- to_qkv: one block-diagonal 1x1-conv matmul for ALL samples ----
    qkv = jnp.dot(wqkv_ref[...], x,
                  preferred_element_type=jnp.float32)                 # (3*bh, N)
    q_raw = qkv[:bh, :]
    k_raw = qkv[bh:2 * bh, :]
    v2 = qkv[2 * bh:, :]

    # q: softmax over dim_head (dim=-2); the `* scale` is folded into the
    # EUP reciprocal of the denominator.
    q3 = q_raw.reshape(g, dim_head, n)
    q_max = jnp.max(q3, axis=1, keepdims=True)
    q_exp = jnp.exp(q3 - q_max)
    q_sum = jnp.sum(q_exp, axis=1, keepdims=True)
    q3 = q_exp * (scale * pl.reciprocal(q_sum, approx=approx_recip))  # (g, dh, N)

    # k: softmax over the spatial axis (dim=-1) -> pure per-row lane reduction.
    k_max = jnp.max(k_raw, axis=1, keepdims=True)
    k_exp = jnp.exp(k_raw - k_max)
    k_sum = jnp.sum(k_exp, axis=1, keepdims=True)
    k2 = k_exp * pl.reciprocal(k_sum, approx=approx_recip)            # (bh, N)

    # ---- linear attention ----
    if fuse_attention:
        # All samples and heads share a single matmul pair; the (sample, head)
        # block-diagonal mask kills cross terms that ride on MXU tile padding.
        q2 = q3.reshape(bh, n)
        ctx_t = lax.dot_general(                                      # (bh, bh)
            v2.astype(attn_dtype), k2.astype(attn_dtype),
            (((1,), (1,)), ((), ())), preferred_element_type=jnp.float32)
        ctx_t = ctx_t * mask_ref[...]
        out_hidden = jnp.dot(ctx_t.astype(attn_dtype), q2.astype(attn_dtype),
                             preferred_element_type=jnp.float32)      # (bh, N)
    else:
        # Fallback when block_b*hidden exceeds one MXU tile: batched
        # per-(sample, head) matmuls (no wasted FLOPs on masked cross terms).
        v3 = v2.reshape(g, dim_head, n).astype(attn_dtype)
        k3 = k2.reshape(g, dim_head, n).astype(attn_dtype)
        ctx_t3 = lax.dot_general(v3, k3, (((2,), (2,)), ((0,), (0,))),
                                 preferred_element_type=jnp.float32)  # (g, e, d)
        out3 = lax.dot_general(ctx_t3.astype(attn_dtype), q3.astype(attn_dtype),
                               (((2,), (1,)), ((0,), (0,))),
                               preferred_element_type=jnp.float32)    # (g, e, N)
        out_hidden = out3.reshape(bh, n)

    # ---- to_out: one block-diagonal 1x1-conv matmul + single bias add ----
    proj = jnp.dot(wout_ref[...], out_hidden.astype(mm_dtype),
                   preferred_element_type=jnp.float32) + bout_ref[...]  # (bb*C, N)

    # ---- GroupNorm(1, C): per-sample stats, two-pass (centered) variance ----
    samp = samp_ref[...]                                              # (bb*C, bb*C)
    row_s = jnp.sum(proj, axis=1, keepdims=True)                      # (bb*C, 1)
    mean_rows = jnp.dot(samp, row_s,
                        preferred_element_type=jnp.float32) * inv_count
    d = proj - mean_rows
    row_ss = jnp.sum(d * d, axis=1, keepdims=True)
    var_rows = jnp.dot(samp, row_ss,
                       preferred_element_type=jnp.float32) * inv_count
    rstd_rows = lax.rsqrt(var_rows + eps)
    o_ref[...] = (d * (gamma_ref[...] * rstd_rows)
                  + beta_ref[...]).astype(o_ref.dtype)


def _valid_block(b, c, d):
    # block rows (d*C) must be a multiple of 8 sublanes, or cover the full array.
    return b % d == 0 and ((d * c) % 8 == 0 or d == b)


def _estimate_vmem_bytes(d, c, n, hidden, in_itemsize):
    bc, bh = d * c, d * hidden
    io_blocks = 2 * (bc * n * in_itemsize + bc * n * 4)   # double-buffered in + f32 out
    weights = 2 * 4 * (3 * bh * bc + bc * bh + bh * bh + bc * bc + 3 * bc)
    inter = 4 * n * (3 * bh + 2 * bh + bh + bc)           # qkv, q/k, out_hidden, proj
    return io_blocks + weights + inter


def _choose_block_b(b, c, n, hidden, in_itemsize, vmem_budget, mxu_rows=256):
    valid = [d for d in range(1, b + 1)
             if _valid_block(b, c, d)
             and d * hidden <= mxu_rows and d * c <= mxu_rows
             and _estimate_vmem_bytes(d, c, n, hidden, in_itemsize) <= vmem_budget]
    if not valid:
        return b            # single full-batch block is always layout-legal
    best = max(valid)
    # v7x has 2 TensorCores: keep >= 2 grid steps when a still-large
    # (>= 512 KiB) input block is possible with half the batch per step.
    half = [d for d in valid if d <= b // 2]
    if best == b and half:
        d2 = max(half)
        if d2 * c * n * in_itemsize >= (512 << 10):
            best = d2
    return best


def linear_attention(x, wqkv, wout, bout, gamma, beta, *, heads, dim_head,
                     eps=1e-5, block_b=None, use_bf16_matmul=False,
                     attn_in_bf16=False, approx_recip=True,
                     fuse_attention=None):
    b, c, hh, ww = x.shape
    n = hh * ww
    hidden = heads * dim_head
    assert wqkv.shape == (3 * hidden, c)
    assert wout.shape == (c, hidden)

    mm_dtype = jnp.bfloat16 if use_bf16_matmul else jnp.float32
    # Softmaxed q/k matmuls stay f32 unless explicitly relaxed (bf16 mantissa
    # loss grows with N and can exceed tolerance).
    attn_dtype = jnp.bfloat16 if attn_in_bf16 else jnp.float32

    # Device-derived VMEM budget (v7x: 64 MiB/TC, v5e/v6e: 128 MiB).
    try:
        vmem_cap = int(pltpu.get_tpu_info().vmem_capacity_bytes)
    except Exception:
        vmem_cap = 64 << 20
    vmem_budget = int(vmem_cap * 0.8)

    in_itemsize = jnp.dtype(mm_dtype).itemsize
    if block_b is None:
        block_b = _choose_block_b(b, c, n, hidden, in_itemsize, vmem_budget)
    assert _valid_block(b, c, block_b), (
        "block_b must divide batch and give sublane-aligned blocks "
        "(block_b*C % 8 == 0) or cover the whole batch")

    bc = block_b * c
    bh = block_b * hidden
    if fuse_attention is None:
        # Fuse all samples+heads into one masked matmul pair only while the
        # stacked rows fit ~one MXU tile; otherwise use the batched per-head path.
        fuse_attention = bh <= 256

    # ---- host-side constant prep (hoisted out of the grid-step body) ----
    f32 = jnp.float32
    x2 = x.reshape(b * c, n).astype(mm_dtype)            # (B*C, N), row = b*C + c
    eye = jnp.eye(block_b, dtype=f32)
    wq, wk, wv = wqkv[:hidden], wqkv[hidden:2 * hidden], wqkv[2 * hidden:]
    # Block-diagonal per-sample weights; q/k/v groups kept contiguous so the
    # kernel slices whole sublane groups (no strided row gather).
    wqkv_bd = jnp.concatenate(
        [jnp.kron(eye, wq.astype(f32)),
         jnp.kron(eye, wk.astype(f32)),
         jnp.kron(eye, wv.astype(f32))], axis=0).astype(mm_dtype)   # (3*bh, bc)
    wout_bd = jnp.kron(eye, wout.astype(f32)).astype(mm_dtype)      # (bc, bh)
    bout_r = jnp.tile(bout.reshape(c, 1).astype(f32), (block_b, 1))  # (bc, 1)
    gamma_r = jnp.tile(gamma.reshape(c, 1).astype(f32), (block_b, 1))
    beta_r = jnp.tile(beta.reshape(c, 1).astype(f32), (block_b, 1))
    row_samp = jnp.arange(bc) // c
    samp = (row_samp[:, None] == row_samp[None, :]).astype(f32)      # (bc, bc)

    inputs = [x2, wqkv_bd, wout_bd, bout_r, gamma_r, beta_r, samp]
    in_specs = [
        pl.BlockSpec((bc, n), lambda i: (i, 0)),
        pl.BlockSpec((3 * bh, bc), lambda i: (0, 0)),
        pl.BlockSpec((bc, bh), lambda i: (0, 0)),
        pl.BlockSpec((bc, 1), lambda i: (0, 0)),
        pl.BlockSpec((bc, 1), lambda i: (0, 0)),
        pl.BlockSpec((bc, 1), lambda i: (0, 0)),
        pl.BlockSpec((bc, bc), lambda i: (0, 0)),
    ]
    if fuse_attention:
        head_id = jnp.arange(bh) // dim_head      # encodes (sample, head)
        mask = (head_id[:, None] == head_id[None, :]).astype(f32)    # (bh, bh)
        inputs.append(mask)
        in_specs.append(pl.BlockSpec((bh, bh), lambda i: (0, 0)))

    kernel = functools.partial(
        _linear_attention_kernel, heads=heads, dim_head=dim_head,
        block_b=block_b, eps=eps, mm_dtype=mm_dtype, attn_dtype=attn_dtype,
        approx_recip=approx_recip, fuse_attention=fuse_attention)

    flops = 2 * b * n * (3 * hidden * c + 2 * hidden * hidden + c * hidden)
    bytes_accessed = (x2.size * x2.dtype.itemsize + b * c * n * 4
                      + sum(int(a.size) * a.dtype.itemsize for a in inputs[1:]))
    cost = pl.CostEstimate(flops=int(flops),
                           transcendentals=int(2 * b * hidden * n),
                           bytes_accessed=int(bytes_accessed))

    out = pl.pallas_call(
        kernel,
        out_shape=jax.ShapeDtypeStruct((b * c, n), jnp.float32),
        grid=(b // block_b,),
        in_specs=in_specs,
        out_specs=pl.BlockSpec((bc, n), lambda i: (i, 0)),
        compiler_params=pltpu.CompilerParams(
            dimension_semantics=("parallel",),
            vmem_limit_bytes=vmem_budget),
        cost_estimate=cost,
    )(*inputs)
    return out.reshape(b, c, hh, ww)


def linear_attention_reference(x, wqkv, wout, bout, gamma, beta, *, heads,
                               dim_head, eps=1e-5):
    b, c, h, w = x.shape
    n = h * w
    hidden = heads * dim_head
    xf = x.reshape(b, c, n)
    qkv = jnp.einsum('oc,bcn->bon', wqkv, xf)
    q, k, v = jnp.split(qkv, 3, axis=1)
    q = q.reshape(b, heads, dim_head, n)
    k = k.reshape(b, heads, dim_head, n)
    v = v.reshape(b, heads, dim_head, n)
    q = jax.nn.softmax(q, axis=-2) * dim_head ** (-0.5)
    k = jax.nn.softmax(k, axis=-1)
    context = jnp.einsum('bhdn,bhen->bhde', k, v)
    out = jnp.einsum('bhde,bhdn->bhen', context, q)
    out = out.reshape(b, hidden, n)
    proj = jnp.einsum('oc,bcn->bon', wout, out) + bout[None, :, None]
    mean = proj.mean(axis=(1, 2), keepdims=True)
    var = ((proj - mean) ** 2).mean(axis=(1, 2), keepdims=True)
    normed = (proj - mean) / jnp.sqrt(var + eps)
    y = normed * gamma[None, :, None] + beta[None, :, None]
    return y.reshape(b, c, h, w)


if __name__ == "__main__":
    # Small shapes consistent with the module's forward.
    B, DIM, H, W = 2, 4, 16, 16
    HEADS, DIM_HEAD = 2, 8
    HIDDEN = HEADS * DIM_HEAD

    key = jax.random.PRNGKey(0)
    kx, k1, k2, k3, k4, k5 = jax.random.split(key, 6)

    x = jax.random.normal(kx, (B, DIM, H, W), dtype=jnp.float32)
    wqkv = 0.1 * jax.random.normal(k1, (3 * HIDDEN, DIM), dtype=jnp.float32)
    wout = 0.1 * jax.random.normal(k2, (DIM, HIDDEN), dtype=jnp.float32)
    bout = 0.1 * jax.random.normal(k3, (DIM,), dtype=jnp.float32)
    gamma = 1.0 + 0.1 * jax.random.normal(k4, (DIM,), dtype=jnp.float32)
    beta = 0.1 * jax.random.normal(k5, (DIM,), dtype=jnp.float32)

    ref = linear_attention_reference(x, wqkv, wout, bout, gamma, beta,
                                     heads=HEADS, dim_head=DIM_HEAD)

    # Auto block_b (picks block_b=2 here -> sublane-dense (8, N) blocks) with the
    # fully fused sample+head masked-matmul attention path.
    out_fused = jax.block_until_ready(
        linear_attention(x, wqkv, wout, bout, gamma, beta,
                         heads=HEADS, dim_head=DIM_HEAD,
                         use_bf16_matmul=False))
    np.testing.assert_allclose(np.asarray(out_fused), np.asarray(ref),
                               rtol=5e-3, atol=5e-3)

    # Batched per-head fallback path (auto-selected when block_b*hidden exceeds
    # one MXU tile); exercised explicitly here for correctness coverage.
    out_perhead = jax.block_until_ready(
        linear_attention(x, wqkv, wout, bout, gamma, beta,
                         heads=HEADS, dim_head=DIM_HEAD, block_b=2,
                         fuse_attention=False, use_bf16_matmul=False))
    np.testing.assert_allclose(np.asarray(out_perhead), np.asarray(ref),
                               rtol=5e-3, atol=5e-3)

    print("KERNEL_OK")
</pallas_src>

<mosaic_0001>
module attributes {stable_mosaic.version = 11 : i64} {
  func.func @_linear_attention_kernel(%arg0: i32, %arg1: memref<8x256xf32, #tpu.memory_space<vmem>>, %arg2: memref<96x8xf32, #tpu.memory_space<vmem>>, %arg3: memref<8x32xf32, #tpu.memory_space<vmem>>, %arg4: memref<8x1xf32, #tpu.memory_space<vmem>>, %arg5: memref<8x1xf32, #tpu.memory_space<vmem>>, %arg6: memref<8x1xf32, #tpu.memory_space<vmem>>, %arg7: memref<8x8xf32, #tpu.memory_space<vmem>>, %arg8: memref<32x32xf32, #tpu.memory_space<vmem>>, %arg9: memref<8x256xf32, #tpu.memory_space<vmem>>) attributes {dimension_semantics = [#tpu.dimension_semantics<parallel>], iteration_bounds = array<i64: 1>, scalar_prefetch = 0 : i64, scratch_operands = 0 : i64, tpu.core_type = #tpu.core_type<tc>, window_params = [{transform_indices = @transform_0, window_bounds = array<i64: 8, 256>}, {pipeline_mode = #tpu.pipeline_mode<synchronous>, transform_indices = @transform_1, window_bounds = array<i64: 96, 8>}, {pipeline_mode = #tpu.pipeline_mode<synchronous>, transform_indices = @transform_2, window_bounds = array<i64: 8, 32>}, {pipeline_mode = #tpu.pipeline_mode<synchronous>, transform_indices = @transform_3, window_bounds = array<i64: 8, 1>}, {pipeline_mode = #tpu.pipeline_mode<synchronous>, transform_indices = @transform_4, window_bounds = array<i64: 8, 1>}, {pipeline_mode = #tpu.pipeline_mode<synchronous>, transform_indices = @transform_5, window_bounds = array<i64: 8, 1>}, {pipeline_mode = #tpu.pipeline_mode<synchronous>, transform_indices = @transform_6, window_bounds = array<i64: 8, 8>}, {pipeline_mode = #tpu.pipeline_mode<synchronous>, transform_indices = @transform_7, window_bounds = array<i64: 32, 32>}, {transform_indices = @transform_8, window_bounds = array<i64: 8, 256>}]} {
    %c0 = arith.constant 0 : index
    %c0_0 = arith.constant 0 : index
    %0 = vector.load %arg1[%c0, %c0_0] : memref<8x256xf32, #tpu.memory_space<vmem>>, vector<8x256xf32>
    %c0_1 = arith.constant 0 : index
    %c0_2 = arith.constant 0 : index
    %1 = vector.load %arg2[%c0_1, %c0_2] : memref<96x8xf32, #tpu.memory_space<vmem>>, vector<96x8xf32>
    %cst = arith.constant dense<0.000000e+00> : vector<96x256xf32>
    %2 = tpu.matmul %1, %0, %cst {dimension_numbers = #tpu.dot_dimension_numbers<[1], [0], [0], [1], [0, 0, 1, 1], [], []>} : vector<96x8xf32>, vector<8x256xf32>, vector<96x256xf32> -> vector<96x256xf32>
    %3 = vector.extract_strided_slice %2 {offsets = [0, 0], sizes = [32, 256], strides = [1, 1]} : vector<96x256xf32> to vector<32x256xf32>
    %4 = vector.extract_strided_slice %2 {offsets = [32, 0], sizes = [32, 256], strides = [1, 1]} : vector<96x256xf32> to vector<32x256xf32>
    %5 = vector.extract_strided_slice %2 {offsets = [64, 0], sizes = [32, 256], strides = [1, 1]} : vector<96x256xf32> to vector<32x256xf32>
    %6 = vector.shape_cast %3 : vector<32x256xf32> to vector<4x8x256xf32>
    %cst_3 = arith.constant dense<0xFF800000> : vector<4x256xf32>
    %7 = vector.multi_reduction <maximumf>, %6, %cst_3 [1] : vector<4x8x256xf32> to vector<4x256xf32>
    %8 = vector.shape_cast %7 : vector<4x256xf32> to vector<4x1x256xf32>
    %9 = vector.broadcast %8 : vector<4x1x256xf32> to vector<4x8x256xf32>
    %10 = arith.subf %6, %9 : vector<4x8x256xf32>
    %11 = math.exp %10 : vector<4x8x256xf32>
    %cst_4 = arith.constant dense<0.000000e+00> : vector<4x256xf32>
    %12 = vector.multi_reduction <add>, %11, %cst_4 [1] : vector<4x8x256xf32> to vector<4x256xf32>
    %13 = vector.shape_cast %12 : vector<4x256xf32> to vector<4x1x256xf32>
    %14 = tpu.reciprocal %13 {approx = true} : vector<4x1x256xf32> -> vector<4x1x256xf32>
    %cst_5 = arith.constant 0.353553385 : f32
    %15 = vector.broadcast %cst_5 : f32 to vector<4x1x256xf32>
    %16 = arith.mulf %15, %14 : vector<4x1x256xf32>
    %17 = vector.broadcast %16 : vector<4x1x256xf32> to vector<4x8x256xf32>
    %18 = arith.mulf %11, %17 : vector<4x8x256xf32>
    %cst_6 = arith.constant dense<0xFF800000> : vector<32xf32>
    %19 = vector.multi_reduction <maximumf>, %4, %cst_6 [1] : vector<32x256xf32> to vector<32xf32>
    %20 = vector.shape_cast %19 : vector<32xf32> to vector<32x1xf32>
    %21 = vector.broadcast %20 : vector<32x1xf32> to vector<32x256xf32>
    %22 = arith.subf %4, %21 : vector<32x256xf32>
    %23 = math.exp %22 : vector<32x256xf32>
    %cst_7 = arith.constant dense<0.000000e+00> : vector<32xf32>
    %24 = vector.multi_reduction <add>, %23, %cst_7 [1] : vector<32x256xf32> to vector<32xf32>
    %25 = vector.shape_cast %24 : vector<32xf32> to vector<32x1xf32>
    %26 = tpu.reciprocal %25 {approx = true} : vector<32x1xf32> -> vector<32x1xf32>
    %27 = vector.broadcast %26 : vector<32x1xf32> to vector<32x256xf32>
    %28 = arith.mulf %23, %27 : vector<32x256xf32>
    %29 = vector.shape_cast %18 : vector<4x8x256xf32> to vector<32x256xf32>
    %cst_8 = arith.constant dense<0.000000e+00> : vector<32x32xf32>
    %30 = tpu.matmul %5, %28, %cst_8 {dimension_numbers = #tpu.dot_dimension_numbers<[1], [1], [0], [0], [0, 0, 1, 0], [], []>} : vector<32x256xf32>, vector<32x256xf32>, vector<32x32xf32> -> vector<32x32xf32>
    %c0_9 = arith.constant 0 : index
    %c0_10 = arith.constant 0 : index
    %31 = vector.load %arg8[%c0_9, %c0_10] : memref<32x32xf32, #tpu.memory_space<vmem>>, vector<32x32xf32>
    %32 = arith.mulf %30, %31 : vector<32x32xf32>
    %cst_11 = arith.constant dense<0.000000e+00> : vector<32x256xf32>
    %33 = tpu.matmul %32, %29, %cst_11 {dimension_numbers = #tpu.dot_dimension_numbers<[1], [0], [0], [1], [0, 0, 1, 1], [], []>} : vector<32x32xf32>, vector<32x256xf32>, vector<32x256xf32> -> vector<32x256xf32>
    %c0_12 = arith.constant 0 : index
    %c0_13 = arith.constant 0 : index
    %34 = vector.load %arg3[%c0_12, %c0_13] : memref<8x32xf32, #tpu.memory_space<vmem>>, vector<8x32xf32>
    %cst_14 = arith.constant dense<0.000000e+00> : vector<8x256xf32>
    %35 = tpu.matmul %34, %33, %cst_14 {dimension_numbers = #tpu.dot_dimension_numbers<[1], [0], [0], [1], [0, 0, 1, 1], [], []>} : vector<8x32xf32>, vector<32x256xf32>, vector<8x256xf32> -> vector<8x256xf32>
    %c0_15 = arith.constant 0 : index
    %c0_16 = arith.constant 0 : index
    %36 = vector.load %arg4[%c0_15, %c0_16] : memref<8x1xf32, #tpu.memory_space<vmem>>, vector<8x1xf32>
    %37 = vector.broadcast %36 : vector<8x1xf32> to vector<8x256xf32>
    %38 = arith.addf %35, %37 : vector<8x256xf32>
    %c0_17 = arith.constant 0 : index
    %c0_18 = arith.constant 0 : index
    %39 = vector.load %arg7[%c0_17, %c0_18] : memref<8x8xf32, #tpu.memory_space<vmem>>, vector<8x8xf32>
    %cst_19 = arith.constant dense<0.000000e+00> : vector<8xf32>
    %40 = vector.multi_reduction <add>, %38, %cst_19 [1] : vector<8x256xf32> to vector<8xf32>
    %41 = vector.shape_cast %40 : vector<8xf32> to vector<8x1xf32>
    %cst_20 = arith.constant dense<0.000000e+00> : vector<8x1xf32>
    %42 = tpu.matmul %39, %41, %cst_20 {dimension_numbers = #tpu.dot_dimension_numbers<[1], [0], [0], [1], [0, 0, 1, 1], [], []>} : vector<8x8xf32>, vector<8x1xf32>, vector<8x1xf32> -> vector<8x1xf32>
    %cst_21 = arith.constant 9.765625E-4 : f32
    %43 = vector.broadcast %cst_21 : f32 to vector<8x1xf32>
    %44 = arith.mulf %42, %43 : vector<8x1xf32>
    %45 = vector.broadcast %44 : vector<8x1xf32> to vector<8x256xf32>
    %46 = arith.subf %38, %45 : vector<8x256xf32>
    %47 = arith.mulf %46, %46 : vector<8x256xf32>
    %cst_22 = arith.constant dense<0.000000e+00> : vector<8xf32>
    %48 = vector.multi_reduction <add>, %47, %cst_22 [1] : vector<8x256xf32> to vector<8xf32>
    %49 = vector.shape_cast %48 : vector<8xf32> to vector<8x1xf32>
    %cst_23 = arith.constant dense<0.000000e+00> : vector<8x1xf32>
    %50 = tpu.matmul %39, %49, %cst_23 {dimension_numbers = #tpu.dot_dimension_numbers<[1], [0], [0], [1], [0, 0, 1, 1], [], []>} : vector<8x8xf32>, vector<8x1xf32>, vector<8x1xf32> -> vector<8x1xf32>
    %cst_24 = arith.constant 9.765625E-4 : f32
    %51 = vector.broadcast %cst_24 : f32 to vector<8x1xf32>
    %52 = arith.mulf %50, %51 : vector<8x1xf32>
    %cst_25 = arith.constant 9.99999974E-6 : f32
    %53 = vector.broadcast %cst_25 : f32 to vector<8x1xf32>
    %54 = arith.addf %52, %53 : vector<8x1xf32>
    %55 = math.rsqrt %54 : vector<8x1xf32>
    %c0_26 = arith.constant 0 : index
    %c0_27 = arith.constant 0 : index
    %56 = vector.load %arg5[%c0_26, %c0_27] : memref<8x1xf32, #tpu.memory_space<vmem>>, vector<8x1xf32>
    %57 = arith.mulf %56, %55 : vector<8x1xf32>
    %58 = vector.broadcast %57 : vector<8x1xf32> to vector<8x256xf32>
    %59 = arith.mulf %46, %58 : vector<8x256xf32>
    %c0_28 = arith.constant 0 : index
    %c0_29 = arith.constant 0 : index
    %60 = vector.load %arg6[%c0_28, %c0_29] : memref<8x1xf32, #tpu.memory_space<vmem>>, vector<8x1xf32>
    %61 = vector.broadcast %60 : vector<8x1xf32> to vector<8x256xf32>
    %62 = arith.addf %59, %61 : vector<8x256xf32>
    %c0_30 = arith.constant 0 : index
    %c0_31 = arith.constant 0 : index
    %63 = vector.load %arg9[%c0_30, %c0_31] : memref<8x256xf32, #tpu.memory_space<vmem>>, vector<8x256xf32>
    tpu.vector_store %arg9[%c0_30, %c0_31], %62 {strides = array<i32>} : memref<8x256xf32, #tpu.memory_space<vmem>>, vector<8x256xf32>,
    return
  }
  func.func @transform_0(%arg0: i32) -> (i32, i32) {
    %c0_i32 = arith.constant 0 : i32
    %c0_i32_0 = arith.constant 0 : i32
    return %arg0, %c0_i32 : i32, i32
  }
  func.func @transform_1(%arg0: i32) -> (i32, i32) {
    %c0_i32 = arith.constant 0 : i32
    %c0_i32_0 = arith.constant 0 : i32
    %c0_i32_1 = arith.constant 0 : i32
    return %c0_i32, %c0_i32_0 : i32, i32
  }
  func.func @transform_2(%arg0: i32) -> (i32, i32) {
    %c0_i32 = arith.constant 0 : i32
    %c0_i32_0 = arith.constant 0 : i32
    %c0_i32_1 = arith.constant 0 : i32
    return %c0_i32, %c0_i32_0 : i32, i32
  }
  func.func @transform_3(%arg0: i32) -> (i32, i32) {
    %c0_i32 = arith.constant 0 : i32
    %c0_i32_0 = arith.constant 0 : i32
    %c0_i32_1 = arith.constant 0 : i32
    return %c0_i32, %c0_i32_0 : i32, i32
  }
  func.func @transform_4(%arg0: i32) -> (i32, i32) {
    %c0_i32 = arith.constant 0 : i32
    %c0_i32_0 = arith.constant 0 : i32
    %c0_i32_1 = arith.constant 0 : i32
    return %c0_i32, %c0_i32_0 : i32, i32
  }
  func.func @transform_5(%arg0: i32) -> (i32, i32) {
    %c0_i32 = arith.constant 0 : i32
    %c0_i32_0 = arith.constant 0 : i32
    %c0_i32_1 = arith.constant 0 : i32
    return %c0_i32, %c0_i32_0 : i32, i32
  }
  func.func @transform_6(%arg0: i32) -> (i32, i32) {
    %c0_i32 = arith.constant 0 : i32
    %c0_i32_0 = arith.constant 0 : i32
    %c0_i32_1 = arith.constant 0 : i32
    return %c0_i32, %c0_i32_0 : i32, i32
  }
  func.func @transform_7(%arg0: i32) -> (i32, i32) {
    %c0_i32 = arith.constant 0 : i32
    %c0_i32_0 = arith.constant 0 : i32
    %c0_i32_1 = arith.constant 0 : i32
    return %c0_i32, %c0_i32_0 : i32, i32
  }
  func.func @transform_8(%arg0: i32) -> (i32, i32) {
    %c0_i32 = arith.constant 0 : i32
    %c0_i32_0 = arith.constant 0 : i32
    return %arg0, %c0_i32 : i32, i32
  }
}

</mosaic_0001>

<llo_original>
// kernel: tpu_custom_call.1
$region0: #{tpu_custom_call.1}
  #allocation0 [shape = 'u32[]', space=smem, size = 0x4, offset = 0x4, fixed_abs, tag = 'smem constant byte address 0x4 - core index']
  #allocation1 [shape = 'u32[72,128]{1,0:T(1,128)}', space=vmem, size = 0x9000, scoped, tag = 'internal scratch']
  %s0 = inlined_call_operand.vmem [shape: f32[8,256], index: 0, kind: input, shape index: {}]
  %s1 = inlined_call_operand.vmem [shape: f32[96,8], index: 1, kind: input, shape index: {}]
  %s2 = inlined_call_operand.vmem [shape: f32[8,32], index: 2, kind: input, shape index: {}]
  %s3 = inlined_call_operand.vmem [shape: f32[8,1], index: 3, kind: input, shape index: {}]
  %s4 = inlined_call_operand.vmem [shape: f32[8,1], index: 4, kind: input, shape index: {}]
  %s5 = inlined_call_operand.vmem [shape: f32[8,1], index: 5, kind: input, shape index: {}]
  %s6 = inlined_call_operand.vmem [shape: f32[8,8], index: 6, kind: input, shape index: {}]
  %s7 = inlined_call_operand.vmem [shape: f32[32,32], index: 7, kind: input, shape index: {}]
  %s8 = inlined_call_operand.hbm [shape: f32[8,256], index: 8, kind: output, shape index: {}]
  %s9 = sld [smem:[#allocation0]]
  $region42: #{tpu_custom_call.1} parent=0
    _
  %s11 = ssub.s32 1, %s9
  %s12 = scalar_select 0, %s11, %s9
  $region1: #{tpu_custom_call.1} parent=0
    #allocation2 [shape = 'u8[8192]{0}', space=vmem, size = 0x2000, scoped, tag = 'output window, operand 0, single buffered']
    #allocation3 [shape = 's32[1]{0}', space=sflag, size = 0x4, scoped, tag = 'scoped memory for tpu_custom_call.1']
    %13 = vsyncpa [#allocation3], 0
    // Predicated region
    $region2: #{tpu_custom_call.1} parent=1 // pred_check
      _
    $region3: #{tpu_custom_call.1} parent=1 // pred_check_branch
      %15 = sbr.rel (0) target = $region5
    $region4: #{tpu_custom_call.1} parent=1 // pred_region
      _
    $region5: #{tpu_custom_call.1} parent=1 // pred_fallthru
      _
    // Predicated region
    $region6: #{tpu_custom_call.1} parent=1 // pred_check
      _
    $region7: #{tpu_custom_call.1} parent=1 // pred_check_branch
      %17 = sbr.rel (0) target = $region9
    $region8: #{tpu_custom_call.1} parent=1 // pred_region
      _
    $region9: #{tpu_custom_call.1} parent=1 // pred_fallthru
      _
    // Predicated region
    $region10: #{tpu_custom_call.1} parent=1 // pred_check
      _
    $region11: #{tpu_custom_call.1} parent=1 // pred_check_branch
      %19 = sbr.rel (0) target = $region13
    $region12: #{tpu_custom_call.1} parent=1 // pred_region
      _
    $region13: #{tpu_custom_call.1} parent=1 // pred_fallthru
      _
    // Predicated region
    $region14: #{tpu_custom_call.1} parent=1 // pred_check
      _
    $region15: #{tpu_custom_call.1} parent=1 // pred_check_branch
      %21 = sbr.rel (0) target = $region17
    $region16: #{tpu_custom_call.1} parent=1 // pred_region
      _
    $region17: #{tpu_custom_call.1} parent=1 // pred_fallthru
      _
    // Predicated region
    $region18: #{tpu_custom_call.1} parent=1 // pred_check
      _
    $region19: #{tpu_custom_call.1} parent=1 // pred_check_branch
      %23 = sbr.rel (0) target = $region21
    $region20: #{tpu_custom_call.1} parent=1 // pred_region
      _
    $region21: #{tpu_custom_call.1} parent=1 // pred_fallthru
      _
    // Predicated region
    $region22: #{tpu_custom_call.1} parent=1 // pred_check
      _
    $region23: #{tpu_custom_call.1} parent=1 // pred_check_branch
      %25 = sbr.rel (0) target = $region25
    $region24: #{tpu_custom_call.1} parent=1 // pred_region
      _
    $region25: #{tpu_custom_call.1} parent=1 // pred_fallthru
      _
    // Predicated region
    $region26: #{tpu_custom_call.1} parent=1 // pred_check
      _
    $region27: #{tpu_custom_call.1} parent=1 // pred_check_branch
      %27 = sbr.rel (0) target = $region29
    $region28: #{tpu_custom_call.1} parent=1 // pred_region
      _
    $region29: #{tpu_custom_call.1} parent=1 // pred_fallthru
      _
    // Predicated region
    $region30: #{tpu_custom_call.1} parent=1 // pred_check
      _
    $region31: #{tpu_custom_call.1} parent=1 // pred_check_branch
      %29 = sbr.rel (0) target = $region33
    $region32: #{tpu_custom_call.1} parent=1 // pred_region
      _
    $region33: #{tpu_custom_call.1} parent=1 // pred_fallthru
      _
    %v30 = vld [vmem:[%s0] sm:$0xff]
    %v31 = vld [vmem:[%s0 + $0x8] sm:$0xff]
    %v32 = vld [vmem:[%s1] sm:$0xff]
    %v33 = vld [vmem:[%s1 + $0x8] sm:$0xff]
    %v34 = vld [vmem:[%s1 + $0x10] sm:$0xff]
    %v35 = vld [vmem:[%s1 + $0x18] sm:$0xff]
    %v36 = vld [vmem:[%s1 + $0x20] sm:$0xff]
    %v37 = vld [vmem:[%s1 + $0x28] sm:$0xff]
    %v38 = vld [vmem:[%s1 + $0x30] sm:$0xff]
    %v39 = vld [vmem:[%s1 + $0x38] sm:$0xff]
    %v40 = vld [vmem:[%s1 + $0x40] sm:$0xff]
    %v41 = vld [vmem:[%s1 + $0x48] sm:$0xff]
    %v42 = vld [vmem:[%s1 + $0x50] sm:$0xff]
    %v43 = vld [vmem:[%s1 + $0x58] sm:$0xff]
    %vm44 = vcmask 64512
    %v46 = vsel %vm44, %v32, 0
    %v49 = vsel %vm44, %v33, 0
    %v52 = vsel %vm44, %v34, 0
    %v55 = vsel %vm44, %v35, 0
    %v58 = vsel %vm44, %v36, 0
    %v61 = vsel %vm44, %v37, 0
    %v64 = vsel %vm44, %v38, 0
    %v67 = vsel %vm44, %v39, 0
    %v70 = vsel %vm44, %v40, 0
    %v73 = vsel %vm44, %v41, 0
    %v76 = vsel %vm44, %v42, 0
    %v79 = vsel %vm44, %v43, 0
    %81 = vmatpush.msra.mxu0 0.0
    %82 = vmatpush.msra.mxu0 0.0
    %83 = vmatpush.msra.mxu0 0.0
    %84 = vmatpush.msra.mxu0 0.0
    %85 = vmatpush.msra.mxu0 0.0
    %86 = vmatpush.msra.mxu0 0.0
    %87 = vmatpush.msra.mxu0 0.0
    %88 = vmatpush.msra.mxu0 0.0
    %89 = vmatpush.msra.mxu0 0.0
    %90 = vmatpush.msra.mxu0 0.0
    %91 = vmatpush.msra.mxu0 0.0
    %92 = vmatpush.msra.mxu0 0.0
    %93 = vmatpush.msra.mxu0 0.0
    %94 = vmatpush.msra.mxu0 0.0
    %95 = vmatpush.msra.mxu0 0.0
    %96 = vmatpush.msra.mxu0 %v30
    %97 = vmatmul.f32.gmra.mxu0 %v46
    %v98 = vpop.f32.mrf.mxu0
    %v99 = vadd.f32 0.0, %v98
    %100 = vmatmul.f32.gmra.mxu0 %v49
    %v101 = vpop.f32.mrf.mxu0
    %v102 = vadd.f32 0.0, %v101
    %103 = vmatmul.f32.gmra.mxu0 %v52
    %v104 = vpop.f32.mrf.mxu0
    %v105 = vadd.f32 0.0, %v104
    %106 = vmatmul.f32.gmra.mxu0 %v55
    %v107 = vpop.f32.mrf.mxu0
    %v108 = vadd.f32 0.0, %v107
    %109 = vmatmul.f32.gmra.mxu0 %v58
    %v110 = vpop.f32.mrf.mxu0
    %v111 = vadd.f32 0.0, %v110
    %112 = vmatmul.f32.gmra.mxu0 %v61
    %v113 = vpop.f32.mrf.mxu0
    %v114 = vadd.f32 0.0, %v113
    %115 = vmatmul.f32.gmra.mxu0 %v64
    %v116 = vpop.f32.mrf.mxu0
    %v117 = vadd.f32 0.0, %v116
    %118 = vmatmul.f32.gmra.mxu0 %v67
    %v119 = vpop.f32.mrf.mxu0
    %v120 = vadd.f32 0.0, %v119
    %121 = vmatmul.f32.gmra.mxu0 %v70
    %v122 = vpop.f32.mrf.mxu0
    %v123 = vadd.f32 0.0, %v122
    %124 = vmatmul.f32.gmra.mxu0 %v73
    %v125 = vpop.f32.mrf.mxu0
    %v126 = vadd.f32 0.0, %v125
    %127 = vmatmul.f32.gmra.mxu0 %v76
    %v128 = vpop.f32.mrf.mxu0
    %v129 = vadd.f32 0.0, %v128
    %130 = vmatmul.f32.gmra.mxu0 %v79
    %v131 = vpop.f32.mrf.mxu0
    %v132 = vadd.f32 0.0, %v131
    %133 = vdwg.mxu0
    %134 = vmatpush.msra.mxu0 0.0
    %135 = vmatpush.msra.mxu0 0.0
    %136 = vmatpush.msra.mxu0 0.0
    %137 = vmatpush.msra.mxu0 0.0
    %138 = vmatpush.msra.mxu0 0.0
    %139 = vmatpush.msra.mxu0 0.0
    %140 = vmatpush.msra.mxu0 0.0
    %141 = vmatpush.msra.mxu0 0.0
    %142 = vmatpush.msra.mxu0 0.0
    %143 = vmatpush.msra.mxu0 0.0
    %144 = vmatpush.msra.mxu0 0.0
    %145 = vmatpush.msra.mxu0 0.0
    %146 = vmatpush.msra.mxu0 0.0
    %147 = vmatpush.msra.mxu0 0.0
    %148 = vmatpush.msra.mxu0 0.0
    %149 = vmatpush.msra.mxu0 %v31
    %150 = vmatmul.f32.gmra.mxu0 %v46
    %v151 = vpop.f32.mrf.mxu0
    %v152 = vadd.f32 0.0, %v151
    %153 = vmatmul.f32.gmra.mxu0 %v49
    %v154 = vpop.f32.mrf.mxu0
    %v155 = vadd.f32 0.0, %v154
    %156 = vmatmul.f32.gmra.mxu0 %v52
    %v157 = vpop.f32.mrf.mxu0
    %v158 = vadd.f32 0.0, %v157
    %159 = vmatmul.f32.gmra.mxu0 %v55
    %v160 = vpop.f32.mrf.mxu0
    %v161 = vadd.f32 0.0, %v160
    %162 = vmatmul.f32.gmra.mxu0 %v58
    %v163 = vpop.f32.mrf.mxu0
    %v164 = vadd.f32 0.0, %v163
    %165 = vmatmul.f32.gmra.mxu0 %v61
    %v166 = vpop.f32.mrf.mxu0
    %v167 = vadd.f32 0.0, %v166
    %168 = vmatmul.f32.gmra.mxu0 %v64
    %v169 = vpop.f32.mrf.mxu0
    %v170 = vadd.f32 0.0, %v169
    %171 = vmatmul.f32.gmra.mxu0 %v67
    %v172 = vpop.f32.mrf.mxu0
    %v173 = vadd.f32 0.0, %v172
    %174 = vmatmul.f32.gmra.mxu0 %v70
    %v175 = vpop.f32.mrf.mxu0
    %v176 = vadd.f32 0.0, %v175
    %177 = vmatmul.f32.gmra.mxu0 %v73
    %v178 = vpop.f32.mrf.mxu0
    %v179 = vadd.f32 0.0, %v178
    %180 = vmatmul.f32.gmra.mxu0 %v76
    %v181 = vpop.f32.mrf.mxu0
    %v182 = vadd.f32 0.0, %v181
    %183 = vmatmul.f32.gmra.mxu0 %v79
    %v184 = vpop.f32.mrf.mxu0
    %v185 = vadd.f32 0.0, %v184
    %186 = vdwg.mxu0
    %v187 = vrot.slane %v99, 4
    %v188 = vmax.f32 %v99, %v187
    %v189 = vrot.slane %v188, 2
    %v190 = vmax.f32 %v188, %v189
    %v191 = vrot.slane %v190, 1
    %v192 = vmax.f32 %v190, %v191
    %v193 = vrot.slane %v152, 4
    %v194 = vmax.f32 %v152, %v193
    %v195 = vrot.slane %v194, 2
    %v196 = vmax.f32 %v194, %v195
    %v197 = vrot.slane %v196, 1
    %v198 = vmax.f32 %v196, %v197
    %v199 = vrot.slane %v102, 4
    %v200 = vmax.f32 %v102, %v199
    %v201 = vrot.slane %v200, 2
    %v202 = vmax.f32 %v200, %v201
    %v203 = vrot.slane %v202, 1
    %v204 = vmax.f32 %v202, %v203
    %v205 = vrot.slane %v155, 4
    %v206 = vmax.f32 %v155, %v205
    %v207 = vrot.slane %v206, 2
    %v208 = vmax.f32 %v206, %v207
    %v209 = vrot.slane %v208, 1
    %v210 = vmax.f32 %v208, %v209
    %v211 = vrot.slane %v105, 4
    %v212 = vmax.f32 %v105, %v211
    %v213 = vrot.slane %v212, 2
    %v214 = vmax.f32 %v212, %v213
    %v215 = vrot.slane %v214, 1
    %v216 = vmax.f32 %v214, %v215
    %v217 = vrot.slane %v158, 4
    %v218 = vmax.f32 %v158, %v217
    %v219 = vrot.slane %v218, 2
    %v220 = vmax.f32 %v218, %v219
    %v221 = vrot.slane %v220, 1
    %v222 = vmax.f32 %v220, %v221
    %v223 = vrot.slane %v108, 4
    %v224 = vmax.f32 %v108, %v223
    %v225 = vrot.slane %v224, 2
    %v226 = vmax.f32 %v224, %v225
    %v227 = vrot.slane %v226, 1
    %v228 = vmax.f32 %v226, %v227
    %v229 = vrot.slane %v161, 4
    %v230 = vmax.f32 %v161, %v229
    %v231 = vrot.slane %v230, 2
    %v232 = vmax.f32 %v230, %v231
    %v233 = vrot.slane %v232, 1
    %v234 = vmax.f32 %v232, %v233
    %v235 = vsub.f32 %v99, %v192
    %v236 = vsub.f32 %v152, %v198
    %v237 = vsub.f32 %v102, %v204
    %v238 = vsub.f32 %v155, %v210
    %v239 = vsub.f32 %v105, %v216
    %v240 = vsub.f32 %v158, %v222
    %v241 = vsub.f32 %v108, %v228
    %v242 = vsub.f32 %v161, %v234
    %v243 = vmul.f32 %v235, 1.442695
    %v244 = vpow.pop %v243
    %v245 = vmul.f32 %v236, 1.442695
    %v246 = vpow.pop %v245
    %v247 = vmul.f32 %v237, 1.442695
    %v248 = vpow.pop %v247
    %v249 = vmul.f32 %v238, 1.442695
    %v250 = vpow.pop %v249
    %v251 = vmul.f32 %v239, 1.442695
    %v252 = vpow.pop %v251
    %v253 = vmul.f32 %v240, 1.442695
    %v254 = vpow.pop %v253
    %v255 = vmul.f32 %v241, 1.442695
    %v256 = vpow.pop %v255
    %v257 = vmul.f32 %v242, 1.442695
    %v258 = vpow.pop %v257
    %v259 = vrot.slane %v244, 4
    %v260 = vadd.f32 %v244, %v259
    %v261 = vrot.slane %v260, 2
    %v262 = vadd.f32 %v260, %v261
    %v263 = vrot.slane %v262, 1
    %v264 = vadd.f32 %v262, %v263
    %v265 = vrot.slane %v246, 4
    %v266 = vadd.f32 %v246, %v265
    %v267 = vrot.slane %v266, 2
    %v268 = vadd.f32 %v266, %v267
    %v269 = vrot.slane %v268, 1
    %v270 = vadd.f32 %v268, %v269
    %v271 = vrot.slane %v248, 4
    %v272 = vadd.f32 %v248, %v271
    %v273 = vrot.slane %v272, 2
    %v274 = vadd.f32 %v272, %v273
    %v275 = vrot.slane %v274, 1
    %v276 = vadd.f32 %v274, %v275
    %v277 = vrot.slane %v250, 4
    %v278 = vadd.f32 %v250, %v277
    %v279 = vrot.slane %v278, 2
    %v280 = vadd.f32 %v278, %v279
    %v281 = vrot.slane %v280, 1
    %v282 = vadd.f32 %v280, %v281
    %v283 = vrot.slane %v252, 4
    %v284 = vadd.f32 %v252, %v283
    %v285 = vrot.slane %v284, 2
    %v286 = vadd.f32 %v284, %v285
    %v287 = vrot.slane %v286, 1
    %v288 = vadd.f32 %v286, %v287
    %v289 = vrot.slane %v254, 4
    %v290 = vadd.f32 %v254, %v289
    %v291 = vrot.slane %v290, 2
    %v292 = vadd.f32 %v290, %v291
    %v293 = vrot.slane %v292, 1
    %v294 = vadd.f32 %v292, %v293
    %v295 = vrot.slane %v256, 4
    %v296 = vadd.f32 %v256, %v295
    %v297 = vrot.slane %v296, 2
    %v298 = vadd.f32 %v296, %v297
    %v299 = vrot.slane %v298, 1
    %v300 = vadd.f32 %v298, %v299
    %v301 = vrot.slane %v258, 4
    %v302 = vadd.f32 %v258, %v301
    %v303 = vrot.slane %v302, 2
    %v304 = vadd.f32 %v302, %v303
    %v305 = vrot.slane %v304, 1
    %v306 = vadd.f32 %v304, %v305
    %v307 = vrcp.pop %v264
    %v308 = vrcp.pop %v270
    %v309 = vrcp.pop %v276
    %v310 = vrcp.pop %v282
    %v311 = vrcp.pop %v288
    %v312 = vrcp.pop %v294
    %v313 = vrcp.pop %v300
    %v314 = vrcp.pop %v306
    %v315 = vmul.f32 %v307, 0.35355338
    %v316 = vmul.f32 %v308, 0.35355338
    %v317 = vmul.f32 %v309, 0.35355338
    %v318 = vmul.f32 %v310, 0.35355338
    %v319 = vmul.f32 %v311, 0.35355338
    %v320 = vmul.f32 %v312, 0.35355338
    %v321 = vmul.f32 %v313, 0.35355338
    %v322 = vmul.f32 %v314, 0.35355338
    %v323 = vmul.f32 %v244, %v315
    %v324 = vmul.f32 %v246, %v316
    %v325 = vmul.f32 %v248, %v317
    %v326 = vmul.f32 %v250, %v318
    %v327 = vmul.f32 %v252, %v319
    %v328 = vmul.f32 %v254, %v320
    %v329 = vmul.f32 %v256, %v321
    %v330 = vmul.f32 %v258, %v322
    %v331 = vmax.f32 %v111, %v164
    %332 = vmax.xlane.f32.xlu0 %v331
    %v333 = vpop.xlane.xlu0 %332
    %v334 = vmax.f32 %v114, %v167
    %335 = vmax.xlane.f32.xlu0 %v334
    %v336 = vpop.xlane.xlu0 %335
    %v337 = vmax.f32 %v117, %v170
    %338 = vmax.xlane.f32.xlu0 %v337
    %v339 = vpop.xlane.xlu0 %338
    %v340 = vmax.f32 %v120, %v173
    %341 = vmax.xlane.f32.xlu0 %v340
    %v342 = vpop.xlane.xlu0 %341
    %v343 = vsub.f32 %v111, %v333
    %v344 = vsub.f32 %v164, %v333
    %v345 = vsub.f32 %v114, %v336
    %v346 = vsub.f32 %v167, %v336
    %v347 = vsub.f32 %v117, %v339
    %v348 = vsub.f32 %v170, %v339
    %v349 = vsub.f32 %v120, %v342
    %v350 = vsub.f32 %v173, %v342
    %v351 = vmul.f32 %v343, 1.442695
    %v352 = vpow.pop %v351
    %v353 = vmul.f32 %v344, 1.442695
    %v354 = vpow.pop %v353
    %v355 = vmul.f32 %v345, 1.442695
    %v356 = vpow.pop %v355
    %v357 = vmul.f32 %v346, 1.442695
    %v358 = vpow.pop %v357
    %v359 = vmul.f32 %v347, 1.442695
    %v360 = vpow.pop %v359
    %v361 = vmul.f32 %v348, 1.442695
    %v362 = vpow.pop %v361
    %v363 = vmul.f32 %v349, 1.442695
    %v364 = vpow.pop %v363
    %v365 = vmul.f32 %v350, 1.442695
    %v366 = vpow.pop %v365
    %v367 = vadd.f32 %v352, %v354
    %368 = vadd.xlane.f32.xlu0 %v367
    %v369 = vpop.xlane.xlu0 %368
    %v370 = vadd.f32 %v356, %v358
    %371 = vadd.xlane.f32.xlu0 %v370
    %v372 = vpop.xlane.xlu0 %371
    %v373 = vadd.f32 %v360, %v362
    %374 = vadd.xlane.f32.xlu0 %v373
    %v375 = vpop.xlane.xlu0 %374
    %v376 = vadd.f32 %v364, %v366
    %377 = vadd.xlane.f32.xlu0 %v376
    %v378 = vpop.xlane.xlu0 %377
    %v379 = vrcp.pop %v369
    %v380 = vrcp.pop %v372
    %v381 = vrcp.pop %v375
    %v382 = vrcp.pop %v378
    %v383 = vmul.f32 %v352, %v379
    %v384 = vmul.f32 %v354, %v379
    %v385 = vmul.f32 %v356, %v380
    %v386 = vmul.f32 %v358, %v380
    %v387 = vmul.f32 %v360, %v381
    %v388 = vmul.f32 %v362, %v381
    %v389 = vmul.f32 %v364, %v382
    %v390 = vmul.f32 %v366, %v382
    %391 = vmatpush.xpose.msra.mxu0 0.0
    %392 = vmatpush.xpose.msra.mxu0 0.0
    %393 = vmatpush.xpose.msra.mxu0 0.0
    %394 = vmatpush.xpose.msra.mxu0 0.0
    %395 = vmatpush.xpose.msra.mxu0 0.0
    %396 = vmatpush.xpose.msra.mxu0 0.0
    %397 = vmatpush.xpose.msra.mxu0 0.0
    %398 = vmatpush.xpose.msra.mxu0 0.0
    %399 = vmatpush.xpose.msra.mxu0 0.0
    %400 = vmatpush.xpose.msra.mxu0 0.0
    %401 = vmatpush.xpose.msra.mxu0 0.0
    %402 = vmatpush.xpose.msra.mxu0 0.0
    %403 = vmatpush.xpose.msra.mxu0 %v389
    %404 = vmatpush.xpose.msra.mxu0 %v387
    %405 = vmatpush.xpose.msra.mxu0 %v385
    %406 = vmatpush.xpose.msra.mxu0 %v383
    %407 = vmatmul.f32.gmra.mxu0 %v123
    %v408 = vpop.f32.mrf.mxu0
    %v409 = vadd.f32 0.0, %v408
    %410 = vmatmul.f32.gmra.mxu0 %v126
    %v411 = vpop.f32.mrf.mxu0
    %v412 = vadd.f32 0.0, %v411
    %413 = vmatmul.f32.gmra.mxu0 %v129
    %v414 = vpop.f32.mrf.mxu0
    %v415 = vadd.f32 0.0, %v414
    %416 = vmatmul.f32.gmra.mxu0 %v132
    %v417 = vpop.f32.mrf.mxu0
    %v418 = vadd.f32 0.0, %v417
    %419 = vdwg.mxu0
    %420 = vmatpush.xpose.msra.mxu0 0.0
    %421 = vmatpush.xpose.msra.mxu0 0.0
    %422 = vmatpush.xpose.msra.mxu0 0.0
    %423 = vmatpush.xpose.msra.mxu0 0.0
    %424 = vmatpush.xpose.msra.mxu0 0.0
    %425 = vmatpush.xpose.msra.mxu0 0.0
    %426 = vmatpush.xpose.msra.mxu0 0.0
    %427 = vmatpush.xpose.msra.mxu0 0.0
    %428 = vmatpush.xpose.msra.mxu0 0.0
    %429 = vmatpush.xpose.msra.mxu0 0.0
    %430 = vmatpush.xpose.msra.mxu0 0.0
    %431 = vmatpush.xpose.msra.mxu0 0.0
    %432 = vmatpush.xpose.msra.mxu0 %v390
    %433 = vmatpush.xpose.msra.mxu0 %v388
    %434 = vmatpush.xpose.msra.mxu0 %v386
    %435 = vmatpush.xpose.msra.mxu0 %v384
    %436 = vmatmul.f32.gmra.mxu0 %v176
    %v437 = vpop.f32.mrf.mxu0
    %v438 = vadd.f32 %v409, %v437
    %439 = vmatmul.f32.gmra.mxu0 %v179
    %v440 = vpop.f32.mrf.mxu0
    %v441 = vadd.f32 %v412, %v440
    %442 = vmatmul.f32.gmra.mxu0 %v182
    %v443 = vpop.f32.mrf.mxu0
    %v444 = vadd.f32 %v415, %v443
    %445 = vmatmul.f32.gmra.mxu0 %v185
    %v446 = vpop.f32.mrf.mxu0
    %v447 = vadd.f32 %v418, %v446
    %448 = vdwg.mxu0
    %v449 = vld [vmem:[%s7] sm:$0xff]
    %v450 = vld [vmem:[%s7 + $0x8] sm:$0xff]
    %v451 = vld [vmem:[%s7 + $0x10] sm:$0xff]
    %v452 = vld [vmem:[%s7 + $0x18] sm:$0xff]
    %v453 = vmul.f32 %v438, %v449
    %v454 = vmul.f32 %v441, %v450
    %v455 = vmul.f32 %v444, %v451
    %v456 = vmul.f32 %v447, %v452
    %vm457 = vcmask 261120
    %v459 = vsel %vm457, %v453, 0
    %v462 = vsel %vm457, %v454, 0
    %v465 = vsel %vm457, %v455, 0
    %v468 = vsel %vm457, %v456, 0
    %470 = vmatpush.msra.mxu0 0.0
    %471 = vmatpush.msra.mxu0 0.0
    %472 = vmatpush.msra.mxu0 0.0
    %473 = vmatpush.msra.mxu0 0.0
    %474 = vmatpush.msra.mxu0 0.0
    %475 = vmatpush.msra.mxu0 0.0
    %476 = vmatpush.msra.mxu0 0.0
    %477 = vmatpush.msra.mxu0 0.0
    %478 = vmatpush.msra.mxu0 0.0
    %479 = vmatpush.msra.mxu0 0.0
    %480 = vmatpush.msra.mxu0 0.0
    %481 = vmatpush.msra.mxu0 0.0
    %482 = vmatpush.msra.mxu0 %v329
    %483 = vmatpush.msra.mxu0 %v327
    %484 = vmatpush.msra.mxu0 %v325
    %485 = vmatpush.msra.mxu0 %v323
    %486 = vmatmul.f32.gmra.mxu0 %v459
    %v487 = vpop.f32.mrf.mxu0
    %v488 = vadd.f32 0.0, %v487
    %489 = vmatmul.f32.gmra.mxu0 %v462
    %v490 = vpop.f32.mrf.mxu0
    %v491 = vadd.f32 0.0, %v490
    %492 = vmatmul.f32.gmra.mxu0 %v465
    %v493 = vpop.f32.mrf.mxu0
    %v494 = vadd.f32 0.0, %v493
    %495 = vmatmul.f32.gmra.mxu0 %v468
    %v496 = vpop.f32.mrf.mxu0
    %v497 = vadd.f32 0.0, %v496
    %498 = vdwg.mxu0
    %499 = vmatpush.msra.mxu0 0.0
    %500 = vmatpush.msra.mxu0 0.0
    %501 = vmatpush.msra.mxu0 0.0
    %502 = vmatpush.msra.mxu0 0.0
    %503 = vmatpush.msra.mxu0 0.0
    %504 = vmatpush.msra.mxu0 0.0
    %505 = vmatpush.msra.mxu0 0.0
    %506 = vmatpush.msra.mxu0 0.0
    %507 = vmatpush.msra.mxu0 0.0
    %508 = vmatpush.msra.mxu0 0.0
    %509 = vmatpush.msra.mxu0 0.0
    %510 = vmatpush.msra.mxu0 0.0
    %511 = vmatpush.msra.mxu0 %v330
    %512 = vmatpush.msra.mxu0 %v328
    %513 = vmatpush.msra.mxu0 %v326
    %514 = vmatpush.msra.mxu0 %v324
    %515 = vmatmul.f32.gmra.mxu0 %v459
    %v516 = vpop.f32.mrf.mxu0
    %v517 = vadd.f32 0.0, %v516
    %518 = vmatmul.f32.gmra.mxu0 %v462
    %v519 = vpop.f32.mrf.mxu0
    %v520 = vadd.f32 0.0, %v519
    %521 = vmatmul.f32.gmra.mxu0 %v465
    %v522 = vpop.f32.mrf.mxu0
    %v523 = vadd.f32 0.0, %v522
    %524 = vmatmul.f32.gmra.mxu0 %v468
    %v525 = vpop.f32.mrf.mxu0
    %v526 = vadd.f32 0.0, %v525
    %527 = vdwg.mxu0
    %v528 = vld [vmem:[%s2] sm:$0xff]
    %v529 = vld [vmem:[%s3] sm:$0xff]
    %531 = vset.pattern.permute.xlu0 0
    %532 = vperm.xlu0 %531, %v529
    %v533 = vpop.permute.xlu0 %532
    %v536 = vsel %vm457, %v528, 0
    %538 = vmatpush.msra.mxu0 0.0
    %539 = vmatpush.msra.mxu0 0.0
    %540 = vmatpush.msra.mxu0 0.0
    %541 = vmatpush.msra.mxu0 0.0
    %542 = vmatpush.msra.mxu0 0.0
    %543 = vmatpush.msra.mxu0 0.0
    %544 = vmatpush.msra.mxu0 0.0
    %545 = vmatpush.msra.mxu0 0.0
    %546 = vmatpush.msra.mxu0 0.0
    %547 = vmatpush.msra.mxu0 0.0
    %548 = vmatpush.msra.mxu0 0.0
    %549 = vmatpush.msra.mxu0 0.0
    %550 = vmatpush.msra.mxu0 %v497
    %551 = vmatpush.msra.mxu0 %v494
    %552 = vmatpush.msra.mxu0 %v491
    %553 = vmatpush.msra.mxu0 %v488
    %554 = vmatmul.f32.gmra.mxu0 %v536
    %v555 = vpop.f32.mrf.mxu0
    %v556 = vadd.f32 %v533, %v555
    %557 = vdwg.mxu0
    %558 = vmatpush.msra.mxu0 0.0
    %559 = vmatpush.msra.mxu0 0.0
    %560 = vmatpush.msra.mxu0 0.0
    %561 = vmatpush.msra.mxu0 0.0
    %562 = vmatpush.msra.mxu0 0.0
    %563 = vmatpush.msra.mxu0 0.0
    %564 = vmatpush.msra.mxu0 0.0
    %565 = vmatpush.msra.mxu0 0.0
    %566 = vmatpush.msra.mxu0 0.0
    %567 = vmatpush.msra.mxu0 0.0
    %568 = vmatpush.msra.mxu0 0.0
    %569 = vmatpush.msra.mxu0 0.0
    %570 = vmatpush.msra.mxu0 %v526
    %571 = vmatpush.msra.mxu0 %v523
    %572 = vmatpush.msra.mxu0 %v520
    %573 = vmatpush.msra.mxu0 %v517
    %574 = vmatmul.f32.gmra.mxu0 %v536
    %v575 = vpop.f32.mrf.mxu0
    %v576 = vadd.f32 %v533, %v575
    %577 = vdwg.mxu0
    %v578 = vld [vmem:[%s6] sm:$0xff]
    %v579 = vadd.f32 %v556, %v576
    %580 = vadd.xlane.f32.xlu0 %v579
    %v581 = vpop.xlane.xlu0 %580
    %v583 = vsel %vm44, %v578, 0
    %585 = vmatpush.msra.mxu0 0.0
    %586 = vmatpush.msra.mxu0 0.0
    %587 = vmatpush.msra.mxu0 0.0
    %588 = vmatpush.msra.mxu0 0.0
    %589 = vmatpush.msra.mxu0 0.0
    %590 = vmatpush.msra.mxu0 0.0
    %591 = vmatpush.msra.mxu0 0.0
    %592 = vmatpush.msra.mxu0 0.0
    %593 = vmatpush.msra.mxu0 0.0
    %594 = vmatpush.msra.mxu0 0.0
    %595 = vmatpush.msra.mxu0 0.0
    %596 = vmatpush.msra.mxu0 0.0
    %597 = vmatpush.msra.mxu0 0.0
    %598 = vmatpush.msra.mxu0 0.0
    %599 = vmatpush.msra.mxu0 0.0
    %600 = vmatpush.msra.mxu0 %v581
    %601 = vmatmul.f32.gmra.mxu0 %v583
    %v602 = vpop.f32.mrf.mxu0
    %v603 = vadd.f32 0.0, %v602
    %604 = vdwg.mxu0
    %v605 = vmul.f32 %v603, 0.0009765625
    %607 = vset.pattern.permute.xlu0 0
    %608 = vperm.xlu0 %607, %v605
    %v609 = vpop.permute.xlu0 %608
    %v611 = vsub.f32 %v556, %v609
    %v612 = vsub.f32 %v576, %v609
    %v613 = vmul.f32 %v611, %v611
    %v614 = vmul.f32 %v612, %v612
    %v615 = vadd.f32 %v613, %v614
    %616 = vadd.xlane.f32.xlu0 %v615
    %v617 = vpop.xlane.xlu0 %616
    %618 = vmatpush.msra.mxu0 0.0
    %619 = vmatpush.msra.mxu0 0.0
    %620 = vmatpush.msra.mxu0 0.0
    %621 = vmatpush.msra.mxu0 0.0
    %622 = vmatpush.msra.mxu0 0.0
    %623 = vmatpush.msra.mxu0 0.0
    %624 = vmatpush.msra.mxu0 0.0
    %625 = vmatpush.msra.mxu0 0.0
    %626 = vmatpush.msra.mxu0 0.0
    %627 = vmatpush.msra.mxu0 0.0
    %628 = vmatpush.msra.mxu0 0.0
    %629 = vmatpush.msra.mxu0 0.0
    %630 = vmatpush.msra.mxu0 0.0
    %631 = vmatpush.msra.mxu0 0.0
    %632 = vmatpush.msra.mxu0 0.0
    %633 = vmatpush.msra.mxu0 %v617
    %634 = vmatmul.f32.gmra.mxu0 %v583
    %v635 = vpop.f32.mrf.mxu0
    %v636 = vadd.f32 0.0, %v635
    %637 = vdwg.mxu0
    %v638 = vmul.f32 %v636, 0.0009765625
    %v639 = vadd.f32 %v638, 1e-05
    %v640 = vrsqrt.pop %v639
    %v641 = vmul.f32 %v640, %v639
    %v642 = vmul.f32 %v641, %v640
    %v643 = vmul.f32 0.5, %v642
    %v644 = vsub.f32 1.5, %v643
    %v645 = vmul.f32 %v640, %v644
    %vm646 = vweird.f32 %v639
    %vm647 = vweird.f32 %v640
    %vm648 = vmor %vm646, %vm647
    %v649 = vsel %vm648, %v640, %v645
    %v650 = vld [vmem:[%s4] sm:$0xff]
    %v651 = vmul.f32 %v650, %v649
    %653 = vset.pattern.permute.xlu0 0
    %654 = vperm.xlu0 %653, %v651
    %v655 = vpop.permute.xlu0 %654
    %v657 = vmul.f32 %v611, %v655
    %v658 = vmul.f32 %v612, %v655
    %v659 = vld [vmem:[%s5] sm:$0xff]
    %661 = vset.pattern.permute.xlu0 0
    %662 = vperm.xlu0 %661, %v659
    %v663 = vpop.permute.xlu0 %662
    %v665 = vadd.f32 %v657, %v663
    %v666 = vadd.f32 %v658, %v663
    %667 = vst [vmem:[#allocation2] sm:$0xff] %v665
    %668 = vst [vmem:[#allocation2 + $0x8] sm:$0xff] %v666
    // Predicated region
    $region34: #{tpu_custom_call.1} parent=1 // pred_check
      _
    $region35: #{tpu_custom_call.1} parent=1 // pred_check_branch
      %670 = sbr.rel (0) target = $region37
    $region36: #{tpu_custom_call.1} parent=1 // pred_region
      %672 = vsyncadd [#allocation3], 0
      %s674 = sshll.u32 [#allocation2], 4
      %s675 = int_to_ptr.vmem [resolvable:$true] %s674
      %s676 = sshll.u32 %s8, 4
      %s677 = int_to_ptr.hbm [resolvable:$true] %s676
      %679 = dma.vmem_to_hbm [thread:$0]  %s675, 256, %s677, [#allocation3]
    $region37: #{tpu_custom_call.1} parent=1 // pred_fallthru
      _
    // Predicated region
    $region38: #{tpu_custom_call.1} parent=1 // pred_check
      _
    $region39: #{tpu_custom_call.1} parent=1 // pred_check_branch
      %681 = sbr.rel (0) target = $region41
    $region40: #{tpu_custom_call.1} parent=1 // pred_region
      %683 = dma.done [#allocation3], 256
    $region41: #{tpu_custom_call.1} parent=1 // pred_fallthru
      _
    %684 = vsyncpa [#allocation3], 1

</llo_original>
